<compile_context>
chip_gen: v7x
topology: tpu7x:2x2x1
jax: 0.10.0
libtpu: 0.0.40
codegen_flags: <defaults>
</compile_context>

<pallas_src>
import numpy as np
import jax
import jax.numpy as jnp
from jax.experimental import pallas as pl
from jax.experimental.pallas import tpu as pltpu


# ----------------- graph helpers (numpy, mirror the PyTorch code) -----------
def k_adjacency(A, k, with_self=False, self_factor=1):
    A = np.asarray(A)
    Iden = np.eye(len(A), dtype=A.dtype)
    if k == 0:
        return Iden
    Ak = np.minimum(np.linalg.matrix_power(A + Iden, k), 1) - \
         np.minimum(np.linalg.matrix_power(A + Iden, k - 1), 1)
    if with_self:
        Ak = Ak + self_factor * Iden
    return Ak


def normalize_digraph(A, dim=0):
    Dl = np.sum(A, dim)
    h, w = A.shape
    Dn = np.zeros((w, w))
    for i in range(w):
        if Dl[i] > 0:
            Dn[i, i] = Dl[i] ** (-1)
    return np.dot(A, Dn)


# ----------------------------- Pallas kernel --------------------------------
def msgcn_kernel(x_ref, m_ref, shift_ref, o_ref):
    # x_ref:     (NB, T, C*V)   NB batch elements, rows = (n,t), lanes = (c,v)
    # m_ref:     (C*V, O*V)     folded  scale * W @ A  matrix
    # shift_ref: (1, O*V)       folded  scale * bias   (per o, repeated over u)
    # o_ref:     (NB, T, O*V)   lane-dense output (O*V multiple of 128)
    nb, t, cv = x_ref.shape
    ov = m_ref.shape[1]

    x = x_ref[...].reshape(nb * t, cv)                       # free view (T % 8 == 0)
    out = jnp.dot(x, m_ref[...],
                  preferred_element_type=jnp.float32)        # (NB*T, O*V) one MXU matmul
    out = out + shift_ref[...]                               # bias + BN shift (broadcast rows)
    out = jnp.maximum(out, 0.0)                              # ReLU
    o_ref[...] = out.reshape(nb, t, ov).astype(o_ref.dtype)


def msgcn_forward(x, A_total, W, bn_scale, bias, *, max_step_bytes=4 << 20):
    """x: (N,C,T,V) f32; A_total: (K,V,V); W: (O,K*C); bn_scale,bias: (O,)."""
    N, C, T, V = x.shape
    K = A_total.shape[0]
    O = W.shape[0]

    # --- host-side algebraic fold:  M[(c,v),(o,u)] = sum_k s[o] W[o,k,c] A[k,v,u]
    W3 = W.reshape(O, K, C)                                   # i = k*C + c
    W_eff = bn_scale[:, None, None] * W3                      # fold BN scale into W
    M = jnp.einsum('okc,kvu->cvou', W_eff, A_total).reshape(C * V, O * V)
    M = M.astype(jnp.float32)
    shift = jnp.repeat(bn_scale * bias, V).reshape(1, O * V).astype(jnp.float32)

    # x (N,C,T,V) -> (N,T,C*V) so lanes carry the contracted (c,v) pair.
    x_r = jnp.transpose(x, (0, 2, 1, 3)).reshape(N, T, C * V)

    # --- pick NB batch elements per grid step: amortize ~0.35us/step overhead
    #     but keep >= 2 grid steps so both v7x TensorCores get work.
    bytes_per_batch = (T * C * V + T * O * V) * 4
    nb = 1
    for cand in range(1, N + 1):
        if N % cand:
            continue
        if N >= 2 and N // cand < 2:
            continue
        if cand * bytes_per_batch > max_step_bytes:
            continue
        nb = cand
    grid = (N // nb,)

    out = pl.pallas_call(
        msgcn_kernel,
        out_shape=jax.ShapeDtypeStruct((N, T, O * V), jnp.float32),
        grid_spec=pltpu.PrefetchScalarGridSpec(
            num_scalar_prefetch=0,
            grid=grid,
            in_specs=[
                pl.BlockSpec((nb, T, C * V), lambda n: (n, 0, 0)),
                pl.BlockSpec((C * V, O * V), lambda n: (0, 0)),
                pl.BlockSpec((1, O * V), lambda n: (0, 0)),
            ],
            out_specs=pl.BlockSpec((nb, T, O * V), lambda n: (n, 0, 0)),
        ),
        compiler_params=pltpu.CompilerParams(
            dimension_semantics=("parallel",)),
    )(x_r, M, shift)

    # lane-dense (N,T,O*V) -> NCHW (N,O,T,V) in the wrapper
    return jnp.transpose(out.reshape(N, T, O, V), (0, 2, 1, 3))


# --------------------------------- main --------------------------------------
if __name__ == "__main__":
    # Small shapes consistent with the module
    N, C, T, V = 2, 4, 8, 16       # batch, in_channels, frames, graph nodes
    K = 3                          # num_scales
    O = 16                         # out_channels

    # Deterministic adjacency: undirected chain graph over V nodes
    A_base = np.zeros((V, V), dtype=np.float32)
    for i in range(V - 1):
        A_base[i, i + 1] = 1.0
        A_base[i + 1, i] = 1.0

    # Buffer A: stack of normalized k-adjacencies (as in MSGCN.__init__)
    A_powers = np.stack(
        [normalize_digraph(k_adjacency(A_base, k, with_self=True))
         for k in range(K)]).astype(np.float32)          # (K, V, V)

    key = jax.random.PRNGKey(0)
    k_pa, k_x, k_w, k_b = jax.random.split(key, 4)

    # PA parameter: uniform(-1e-6, 1e-6), same as nn.init.uniform_
    PA = jax.random.uniform(k_pa, (K, V, V), dtype=jnp.float32,
                            minval=-1e-6, maxval=1e-6)
    A_total = jnp.asarray(A_powers) + PA                 # A + PA

    # Input
    x = jax.random.normal(k_x, (N, C, T, V), dtype=jnp.float32)

    # 1x1 Conv2d(K*C -> O) weight/bias, deterministic init
    W = jax.random.normal(k_w, (O, K * C), dtype=jnp.float32) * 0.1
    b = jax.random.normal(k_b, (O,), dtype=jnp.float32) * 0.1

    # BatchNorm2d (eval): mean=0, var=1, gamma=1, beta=0, eps=1e-5
    eps = 1e-5
    bn_scale = jnp.full((O,), 1.0 / jnp.sqrt(1.0 + eps), dtype=jnp.float32)

    out = msgcn_forward(x, A_total, W, bn_scale, b)
    out = jax.block_until_ready(out)

    # Pure-JAX reference (mirrors the PyTorch forward)
    support_ref = jnp.einsum('kvu,nctv->nkctu', A_total, x).reshape(N, K * C, T, V)
    conv_ref = jnp.einsum('oi,nitv->notv', W, support_ref) + b[None, :, None, None]
    ref = jnp.maximum(conv_ref * bn_scale[None, :, None, None], 0.0)

    assert out.shape == (N, O, T, V)
    np.testing.assert_allclose(np.asarray(out), np.asarray(ref),
                               rtol=1e-4, atol=1e-4)

    print("KERNEL_OK")
</pallas_src>

<mosaic_0001>
module attributes {stable_mosaic.version = 11 : i64} {
  func.func @msgcn_kernel(%arg0: i32, %arg1: memref<1x8x64xf32, #tpu.memory_space<vmem>>, %arg2: memref<64x256xf32, #tpu.memory_space<vmem>>, %arg3: memref<1x256xf32, #tpu.memory_space<vmem>>, %arg4: memref<1x8x256xf32, #tpu.memory_space<vmem>>) attributes {dimension_semantics = [#tpu.dimension_semantics<parallel>], iteration_bounds = array<i64: 2>, scalar_prefetch = 0 : i64, scratch_operands = 0 : i64, tpu.core_type = #tpu.core_type<tc>, window_params = [{transform_indices = @transform_0, window_bounds = array<i64: 1, 8, 64>}, {pipeline_mode = #tpu.pipeline_mode<synchronous>, transform_indices = @transform_1, window_bounds = array<i64: 64, 256>}, {pipeline_mode = #tpu.pipeline_mode<synchronous>, transform_indices = @transform_2, window_bounds = array<i64: 1, 256>}, {transform_indices = @transform_3, window_bounds = array<i64: 1, 8, 256>}]} {
    %c0 = arith.constant 0 : index
    %c0_0 = arith.constant 0 : index
    %c0_1 = arith.constant 0 : index
    %0 = vector.load %arg1[%c0, %c0_0, %c0_1] : memref<1x8x64xf32, #tpu.memory_space<vmem>>, vector<1x8x64xf32>
    %1 = vector.shape_cast %0 : vector<1x8x64xf32> to vector<8x64xf32>
    %c0_2 = arith.constant 0 : index
    %c0_3 = arith.constant 0 : index
    %2 = vector.load %arg2[%c0_2, %c0_3] : memref<64x256xf32, #tpu.memory_space<vmem>>, vector<64x256xf32>
    %cst = arith.constant dense<0.000000e+00> : vector<8x256xf32>
    %3 = tpu.matmul %1, %2, %cst {dimension_numbers = #tpu.dot_dimension_numbers<[1], [0], [0], [1], [0, 0, 1, 1], [], []>} : vector<8x64xf32>, vector<64x256xf32>, vector<8x256xf32> -> vector<8x256xf32>
    %c0_4 = arith.constant 0 : index
    %c0_5 = arith.constant 0 : index
    %4 = vector.load %arg3[%c0_4, %c0_5] : memref<1x256xf32, #tpu.memory_space<vmem>>, vector<1x256xf32>
    %5 = vector.broadcast %4 : vector<1x256xf32> to vector<8x256xf32>
    %6 = arith.addf %3, %5 : vector<8x256xf32>
    %cst_6 = arith.constant 0.000000e+00 : f32
    %7 = vector.broadcast %cst_6 : f32 to vector<8x256xf32>
    %8 = arith.maximumf %6, %7 : vector<8x256xf32>
    %9 = vector.shape_cast %8 : vector<8x256xf32> to vector<1x8x256xf32>
    %c0_7 = arith.constant 0 : index
    %c0_8 = arith.constant 0 : index
    %c0_9 = arith.constant 0 : index
    %10 = vector.load %arg4[%c0_7, %c0_8, %c0_9] : memref<1x8x256xf32, #tpu.memory_space<vmem>>, vector<1x8x256xf32>
    tpu.vector_store %arg4[%c0_7, %c0_8, %c0_9], %9 {strides = array<i32>} : memref<1x8x256xf32, #tpu.memory_space<vmem>>, vector<1x8x256xf32>,
    return
  }
  func.func @transform_0(%arg0: i32) -> (i32, i32, i32) {
    %c0_i32 = arith.constant 0 : i32
    %c0_i32_0 = arith.constant 0 : i32
    %c0_i32_1 = arith.constant 0 : i32
    return %arg0, %c0_i32, %c0_i32_0 : i32, i32, i32
  }
  func.func @transform_1(%arg0: i32) -> (i32, i32) {
    %c0_i32 = arith.constant 0 : i32
    %c0_i32_0 = arith.constant 0 : i32
    %c0_i32_1 = arith.constant 0 : i32
    return %c0_i32, %c0_i32_0 : i32, i32
  }
  func.func @transform_2(%arg0: i32) -> (i32, i32) {
    %c0_i32 = arith.constant 0 : i32
    %c0_i32_0 = arith.constant 0 : i32
    %c0_i32_1 = arith.constant 0 : i32
    return %c0_i32, %c0_i32_0 : i32, i32
  }
  func.func @transform_3(%arg0: i32) -> (i32, i32, i32) {
    %c0_i32 = arith.constant 0 : i32
    %c0_i32_0 = arith.constant 0 : i32
    %c0_i32_1 = arith.constant 0 : i32
    return %arg0, %c0_i32, %c0_i32_0 : i32, i32, i32
  }
}

</mosaic_0001>

<llo_original>
// kernel: tpu_custom_call.1
$region0: #{tpu_custom_call.1}
  #allocation0 [shape = 'u32[]', space=smem, size = 0x4, offset = 0x4, fixed_abs, tag = 'smem constant byte address 0x4 - core index']
  #allocation1 [shape = 'u32[144,128]{1,0:T(1,128)}', space=vmem, size = 0x12000, scoped, tag = 'internal scratch']
  %s0 = inlined_call_operand.hbm [shape: f32[2,8,64], index: 0, kind: input, shape index: {}]
  %s1 = inlined_call_operand.hbm [shape: f32[64,256], index: 1, kind: input, shape index: {}]
  %s2 = inlined_call_operand.vmem [shape: f32[1,256], index: 2, kind: input, shape index: {}]
  %s3 = inlined_call_operand.hbm [shape: f32[2,8,256], index: 3, kind: output, shape index: {}]
  %s4 = sld [smem:[#allocation0]]
  $region53: #{tpu_custom_call.1} parent=0
    _
  %s6 = ssub.s32 1, %s4
  %s7 = scalar_select 0, %s6, %s4
  $region1: #{tpu_custom_call.1} parent=0
    #allocation2 [shape = 'u8[8192]{0}', space=vmem, size = 0x2000, scoped, tag = 'input window, operand 0']
    #allocation3 [shape = 's32[2]{0}', space=sflag, size = 0x8, scoped, tag = 'scoped memory for tpu_custom_call.1']
    #allocation4 [shape = 's32[2]{0}', space=sflag, size = 0x8, scoped, tag = 'scoped memory for tpu_custom_call.1']
    #allocation5 [shape = 'u8[65536]{0}', space=vmem, size = 0x10000, scoped, tag = 'input window, operand 1, single buffered']
    #allocation6 [shape = 's32[1]{0}', space=sflag, size = 0x4, scoped, tag = 'scoped memory for tpu_custom_call.1']
    #allocation7 [shape = 'u8[16384]{0}', space=vmem, size = 0x4000, scoped, tag = 'output window, operand 0']
    %8 = vsyncpa [#allocation3], 0
    %s9 = scalar_lea.sflag [#allocation3], 1
    %10 = vsyncpa %s9, 0
    %11 = vsyncpa [#allocation6], 0
    %12 = vsyncpa [#allocation4], 0
    %s13 = scalar_lea.sflag [#allocation4], 1
    %14 = vsyncpa %s13, 0
    loop: start=0, step=1, limit=4
    $region2: #{tpu_custom_call.1} parent=1 // loop_pre_header
      _
    $region3: #{tpu_custom_call.1} parent=1 // loop_header
      %s16 = sphi 0, %s20
      %p17 = scmp.ge.s32.totalorder %s16, 4
      %s26 = sphi 0, %s28
      %s29 = sphi 0, %s26
      %s30 = sphi 0, %s29
      %s46 = sphi 0, %s30
      %s50 = sphi 0, %s50
      %s52 = sphi 0, %s50
      %s53 = sphi 0, %s52
      %s67 = sphi 0, %s53
      %s71 = sphi 0, %s71
      %s73 = sphi 0, %s71
      %s74 = sphi 0, %s73
      %s88 = sphi 0, %s74
      %s94 = sphi 0, %s96
      %s97 = sphi 0, %s94
      %s98 = sphi 0, %s97
      %s114 = sphi 0, %s98
    $region4: #{tpu_custom_call.1} parent=1 // loop_header_branch
      %19 = sbr.rel (%p17) target = $region8
    $region5: #{tpu_custom_call.1} parent=1 // loop_body
      %s21 = ssub.s32 %s16, 1
      %s22 = ssub.s32 %s16, 2
      %s23 = sadd.s32 %s16, 1
      %s24 = ssub.s32 %s16, %s23
      %p25 = scmp.eq.s32.totalorder %s24, 0
      %s27 = sadd.s32 %s26, 1
      %s28 = scalar_select %p25, %s26, %s27
      %p31 = pneg %p25
      %p32 = scmp.eq.s32.totalorder %s16, 1
      %p33 = por %p31, %p32
      %p34 = scmp.ne.s32.totalorder %s26, %s29
      %p35 = scmp.eq.s32.totalorder %s16, 0
      %p36 = por %p34, %p35
      %p37 = scmp.ne.s32.totalorder %s26, %s29
      %p38 = scmp.eq.s32.totalorder %s21, 1
      %p39 = por %p37, %p38
      %p40 = scmp.ne.s32.totalorder %s29, %s30
      %p41 = scmp.eq.s32.totalorder %s21, 0
      %p42 = por %p40, %p41
      %p43 = scmp.ne.s32.totalorder %s29, %s30
      %p44 = scmp.eq.s32.totalorder %s22, 1
      %p45 = por %p43, %p44
      %p47 = scmp.ne.s32.totalorder %s30, %s46
      %p48 = scmp.eq.s32.totalorder %s22, 0
      %p49 = por %p47, %p48
      %s51 = sadd.s32 %s50, 1
      %p54 = scmp.eq.s32.totalorder %s16, 1
      %p55 = scmp.ne.s32.totalorder %s50, %s52
      %p56 = scmp.eq.s32.totalorder %s16, 0
      %p57 = por %p55, %p56
      %p58 = scmp.ne.s32.totalorder %s50, %s52
      %p59 = scmp.eq.s32.totalorder %s21, 1
      %p60 = por %p58, %p59
      %p61 = scmp.ne.s32.totalorder %s52, %s53
      %p62 = scmp.eq.s32.totalorder %s21, 0
      %p63 = por %p61, %p62
      %p64 = scmp.ne.s32.totalorder %s52, %s53
      %p65 = scmp.eq.s32.totalorder %s22, 1
      %p66 = por %p64, %p65
      %p68 = scmp.ne.s32.totalorder %s53, %s67
      %p69 = scmp.eq.s32.totalorder %s22, 0
      %p70 = por %p68, %p69
      %s72 = sadd.s32 %s71, 1
      %p75 = scmp.eq.s32.totalorder %s16, 1
      %p76 = scmp.ne.s32.totalorder %s71, %s73
      %p77 = scmp.eq.s32.totalorder %s16, 0
      %p78 = por %p76, %p77
      %p79 = scmp.ne.s32.totalorder %s71, %s73
      %p80 = scmp.eq.s32.totalorder %s21, 1
      %p81 = por %p79, %p80
      %p82 = scmp.ne.s32.totalorder %s73, %s74
      %p83 = scmp.eq.s32.totalorder %s21, 0
      %p84 = por %p82, %p83
      %p85 = scmp.ne.s32.totalorder %s73, %s74
      %p86 = scmp.eq.s32.totalorder %s22, 1
      %p87 = por %p85, %p86
      %p89 = scmp.ne.s32.totalorder %s74, %s88
      %p90 = scmp.eq.s32.totalorder %s22, 0
      %p91 = por %p89, %p90
      %s92 = ssub.s32 %s16, %s23
      %p93 = scmp.eq.s32.totalorder %s92, 0
      %s95 = sadd.s32 %s94, 1
      %s96 = scalar_select %p93, %s94, %s95
      %p99 = pneg %p93
      %p100 = scmp.eq.s32.totalorder %s16, 1
      %p101 = por %p99, %p100
      %p102 = scmp.ne.s32.totalorder %s94, %s97
      %p103 = scmp.eq.s32.totalorder %s16, 0
      %p104 = por %p102, %p103
      %p105 = scmp.ne.s32.totalorder %s94, %s97
      %p106 = scmp.eq.s32.totalorder %s21, 1
      %p107 = por %p105, %p106
      %p108 = scmp.ne.s32.totalorder %s97, %s98
      %p109 = scmp.eq.s32.totalorder %s21, 0
      %p110 = por %p108, %p109
      %p111 = scmp.ne.s32.totalorder %s97, %s98
      %p112 = scmp.eq.s32.totalorder %s22, 1
      %p113 = por %p111, %p112
      %p115 = scmp.ne.s32.totalorder %s98, %s114
      %p116 = scmp.eq.s32.totalorder %s22, 0
      %p117 = por %p115, %p116
      %p118 = scmp.le.s32.totalorder 1, %s16
      %p119 = scmp.lt.s32.totalorder %s16, 3
      %p120 = pnand %p118, %p119
      %p121 = pneg %p120
      // Predicated region
      $region9: #{tpu_custom_call.1} parent=5 // pred_check
        _
      $region10: #{tpu_custom_call.1} parent=5 // pred_check_branch
        %123 = sbr.rel (%p120) target = $region12
      $region11: #{tpu_custom_call.1} parent=5 // pred_region
        %s124 = ssub.s32 %s16, 1
        // Predicated region
        $region13: #{tpu_custom_call.1} parent=11 // pred_check
          %p125 = pneg %p63
        $region14: #{tpu_custom_call.1} parent=11 // pred_check_branch
          %127 = sbr.rel (%p125) target = $region16
        $region15: #{tpu_custom_call.1} parent=11 // pred_region
          %s129 = ssub.s32 2048, 2048
          %130 = vsyncadd [#allocation6], %s129
          %s131 = sshll.u32 [#allocation5], 4
          %s132 = int_to_ptr.vmem [resolvable:$true] %s131
          %137 = dma.hbm_to_vmem [thread:$0]  %s1, 2048, %s132, [#allocation6], 256, 256, 16
        $region16: #{tpu_custom_call.1} parent=11 // pred_fallthru
          _
        // Predicated region
        $region17: #{tpu_custom_call.1} parent=11 // pred_check
          %p138 = pneg %p84
        $region18: #{tpu_custom_call.1} parent=11 // pred_check_branch
          %140 = sbr.rel (%p138) target = $region20
        $region19: #{tpu_custom_call.1} parent=11 // pred_region
          _
        $region20: #{tpu_custom_call.1} parent=11 // pred_fallthru
          _
      $region12: #{tpu_custom_call.1} parent=5 // pred_fallthru
        _
      %p141 = scmp.lt.s32.totalorder %s16, 2
      // Predicated region
      $region21: #{tpu_custom_call.1} parent=5 // pred_check
        %p142 = pneg %p141
      $region22: #{tpu_custom_call.1} parent=5 // pred_check_branch
        %144 = sbr.rel (%p142) target = $region24
      $region23: #{tpu_custom_call.1} parent=5 // pred_region
        // Predicated region
        $region25: #{tpu_custom_call.1} parent=23 // pred_check
          %p145 = pneg %p36
        $region26: #{tpu_custom_call.1} parent=23 // pred_check_branch
          %147 = sbr.rel (%p145) target = $region28
        $region27: #{tpu_custom_call.1} parent=23 // pred_region
          %s148 = sand.u32 %s26, 1
          %s149 = scalar_lea.sflag [#allocation3], %s148
          %s150 = sand.u32 %s26, 1
          %s151 = smul.addr %s150, 8
          %s152 = scalar_lea.vmem [#allocation2], %s151
          %s154 = ssub.s32 128, 128
          %155 = vsyncadd %s149, %s154
          %s156 = smul.addr %s16, 128
          %s157 = scalar_lea.hbm %s0, %s156
          %s159 = sshll.u32 %s152, 4
          %s160 = int_to_ptr.vmem [resolvable:$true] %s159
          %162 = dma.hbm_to_vmem [thread:$0]  %s157, 128, %s160, %s149
        $region28: #{tpu_custom_call.1} parent=23 // pred_fallthru
          _
      $region24: #{tpu_custom_call.1} parent=5 // pred_fallthru
        _
      %p163 = scmp.le.s32.totalorder 1, %s16
      %p164 = scmp.lt.s32.totalorder %s16, 3
      %p165 = pnand %p163, %p164
      %p166 = pneg %p165
      // Predicated region
      $region29: #{tpu_custom_call.1} parent=5 // pred_check
        _
      $region30: #{tpu_custom_call.1} parent=5 // pred_check_branch
        %168 = sbr.rel (%p165) target = $region32
      $region31: #{tpu_custom_call.1} parent=5 // pred_region
        %s169 = ssub.s32 %s16, 1
        %s170 = sand.u32 %s29, 1
        %s171 = scalar_lea.sflag [#allocation3], %s170
        %s172 = sand.u32 %s29, 1
        %s173 = smul.addr %s172, 8
        %s174 = scalar_lea.vmem [#allocation2], %s173
        // Predicated region
        $region33: #{tpu_custom_call.1} parent=31 // pred_check
          %p175 = pneg %p42
        $region34: #{tpu_custom_call.1} parent=31 // pred_check_branch
          %177 = sbr.rel (%p175) target = $region36
        $region35: #{tpu_custom_call.1} parent=31 // pred_region
          %178 = dma.done %s171, 128
        $region36: #{tpu_custom_call.1} parent=31 // pred_fallthru
          _
        // Predicated region
        $region37: #{tpu_custom_call.1} parent=31 // pred_check
          %p179 = pneg %p63
        $region38: #{tpu_custom_call.1} parent=31 // pred_check_branch
          %181 = sbr.rel (%p179) target = $region40
        $region39: #{tpu_custom_call.1} parent=31 // pred_region
          %182 = dma.done [#allocation6], 2048
        $region40: #{tpu_custom_call.1} parent=31 // pred_fallthru
          _
        %s183 = sand.u32 %s29, 1
        %s184 = scalar_lea.sflag [#allocation3], %s183
        %s185 = sand.u32 %s29, 1
        %s186 = smul.addr %s185, 8
        %s187 = scalar_lea.vmem [#allocation2], %s186
        %p188 = pneg %p42
        %p189 = pneg %p39
        %p190 = pneg %p63
        %p191 = pneg %p60
        %p192 = pneg %p84
        %p193 = pneg %p81
        %p194 = pneg %p110
        %p195 = pneg %p107
        %s196 = sand.u32 %s97, 1
        %s197 = scalar_lea.sflag [#allocation4], %s196
        %s198 = sand.u32 %s97, 1
        %s199 = smul.addr %s198, 16
        %s200 = scalar_lea.vmem [#allocation7], %s199
        %v201 = vld [vmem:[%s174] sm:$0xff]
        %v202 = vld [vmem:[#allocation5] sm:$0xff]
        %v203 = vld [vmem:[#allocation5 + $0x8] sm:$0xff]
        %v204 = vld [vmem:[#allocation5 + $0x10] sm:$0xff]
        %v205 = vld [vmem:[#allocation5 + $0x18] sm:$0xff]
        %v206 = vld [vmem:[#allocation5 + $0x20] sm:$0xff]
        %v207 = vld [vmem:[#allocation5 + $0x28] sm:$0xff]
        %v208 = vld [vmem:[#allocation5 + $0x30] sm:$0xff]
        %v209 = vld [vmem:[#allocation5 + $0x38] sm:$0xff]
        %v210 = vld [vmem:[#allocation5 + $0x40] sm:$0xff]
        %v211 = vld [vmem:[#allocation5 + $0x48] sm:$0xff]
        %v212 = vld [vmem:[#allocation5 + $0x50] sm:$0xff]
        %v213 = vld [vmem:[#allocation5 + $0x58] sm:$0xff]
        %v214 = vld [vmem:[#allocation5 + $0x60] sm:$0xff]
        %v215 = vld [vmem:[#allocation5 + $0x68] sm:$0xff]
        %v216 = vld [vmem:[#allocation5 + $0x70] sm:$0xff]
        %v217 = vld [vmem:[#allocation5 + $0x78] sm:$0xff]
        %v218 = vld [vmem:[%s2] sm:$0x3]
        %v220 = vlaneseq
        %v221 = vshrl.u32 %v220, 7
        %v222 = vsub.s32 0, %v221
        %v223 = vrot.slane %v218, %v222
        %v224 = vlaneseq
        %v225 = vshrl.u32 %v224, 7
        %v226 = vsub.s32 1, %v225
        %v227 = vrot.slane %v218, %v226
        %vm230 = vcmask 523264
        %v232 = vsel %vm230, %v201, 0
        %234 = vmatprep.subr.mxu0 %v203
        %235 = vmatpush1.msra.mxu0 %v202
        %236 = vmatprep.subr.mxu0 %v205
        %237 = vmatpush1.msra.mxu0 %v204
        %238 = vmatprep.subr.mxu0 %v207
        %239 = vmatpush1.msra.mxu0 %v206
        %240 = vmatprep.subr.mxu0 %v209
        %241 = vmatpush1.msra.mxu0 %v208
        %242 = vmatprep.subr.mxu0 %v211
        %243 = vmatpush1.msra.mxu0 %v210
        %244 = vmatprep.subr.mxu0 %v213
        %245 = vmatpush1.msra.mxu0 %v212
        %246 = vmatprep.subr.mxu0 %v215
        %247 = vmatpush1.msra.mxu0 %v214
        %248 = vmatprep.subr.mxu0 %v217
        %249 = vmatpush1.msra.mxu0 %v216
        %250 = vmatprep.subr.mxu0 0.0
        %251 = vmatpush1.msra.mxu0 0.0
        %252 = vmatprep.subr.mxu0 0.0
        %253 = vmatpush1.msra.mxu0 0.0
        %254 = vmatprep.subr.mxu0 0.0
        %255 = vmatpush1.msra.mxu0 0.0
        %256 = vmatprep.subr.mxu0 0.0
        %257 = vmatpush1.msra.mxu0 0.0
        %258 = vmatprep.subr.mxu0 0.0
        %259 = vmatpush1.msra.mxu0 0.0
        %260 = vmatprep.subr.mxu0 0.0
        %261 = vmatpush1.msra.mxu0 0.0
        %262 = vmatprep.subr.mxu0 0.0
        %263 = vmatpush1.msra.mxu0 0.0
        %264 = vmatprep.subr.mxu0 0.0
        %265 = vmatpush1.msra.mxu0 0.0
        %266 = vmatprep.subr.mxu0 0.0
        %267 = vmatpush1.msra.mxu0 0.0
        %268 = vmatprep.subr.mxu0 0.0
        %269 = vmatpush1.msra.mxu0 0.0
        %270 = vmatprep.subr.mxu0 0.0
        %271 = vmatpush1.msra.mxu0 0.0
        %272 = vmatprep.subr.mxu0 0.0
        %273 = vmatpush1.msra.mxu0 0.0
        %274 = vmatprep.subr.mxu0 0.0
        %275 = vmatpush1.msra.mxu0 0.0
        %276 = vmatprep.subr.mxu0 0.0
        %277 = vmatpush1.msra.mxu0 0.0
        %278 = vmatprep.subr.mxu0 0.0
        %279 = vmatpush1.msra.mxu0 0.0
        %280 = vmatprep.subr.mxu0 0.0
        %281 = vmatpush1.msra.mxu0 0.0
        %282 = vmatprep.subr.mxu0 0.0
        %283 = vmatpush1.msra.mxu0 0.0
        %284 = vmatprep.subr.mxu0 0.0
        %285 = vmatpush1.msra.mxu0 0.0
        %286 = vmatprep.subr.mxu0 0.0
        %287 = vmatpush1.msra.mxu0 0.0
        %288 = vmatprep.subr.mxu0 0.0
        %289 = vmatpush1.msra.mxu0 0.0
        %290 = vmatprep.subr.mxu0 0.0
        %291 = vmatpush1.msra.mxu0 0.0
        %292 = vmatprep.subr.mxu0 0.0
        %293 = vmatpush1.msra.mxu0 0.0
        %294 = vmatprep.subr.mxu0 0.0
        %295 = vmatpush1.msra.mxu0 0.0
        %296 = vmatprep.subr.mxu0 0.0
        %297 = vmatpush1.msra.mxu0 0.0
        %298 = vmatprep.mubr.f32.mxu0 0.0
        %299 = vmatmul.mubr.f32.gmra.mrb[0].mxu0 %v232
        %v300 = vpop.f32.mrb[0].mxu0
        %v301 = vadd.f32 %v223, %v300
        %v302 = vpop.f32.mrb[0].mxu0
        %v303 = vadd.f32 %v227, %v302
        %304 = vdwg.mxu0
        %v305 = vmax.f32 %v301, 0.0
        %v306 = vmax.f32 %v303, 0.0
        %307 = vst [vmem:[%s200] sm:$0xff] %v305
        %308 = vst [vmem:[%s200 + $0x8] sm:$0xff] %v306
        %s309 = sand.u32 %s97, 1
        %s310 = scalar_lea.sflag [#allocation4], %s309
        %s311 = sand.u32 %s97, 1
        %s312 = smul.addr %s311, 16
        %s313 = scalar_lea.vmem [#allocation7], %s312
        // Predicated region
        $region41: #{tpu_custom_call.1} parent=31 // pred_check
          %p314 = pneg %p107
        $region42: #{tpu_custom_call.1} parent=31 // pred_check_branch
          %316 = sbr.rel (%p314) target = $region44
        $region43: #{tpu_custom_call.1} parent=31 // pred_region
          %s318 = ssub.s32 256, 256
          %319 = vsyncadd %s310, %s318
          %s320 = smul.addr %s21, 2
          %s321 = smul.addr %s320, 128
          %s322 = scalar_lea.hbm %s3, %s321
          %s324 = sshll.u32 %s313, 4
          %s325 = int_to_ptr.vmem [resolvable:$true] %s324
          %327 = dma.vmem_to_hbm [thread:$0]  %s325, 256, %s322, %s310
        $region44: #{tpu_custom_call.1} parent=31 // pred_fallthru
          _
      $region32: #{tpu_custom_call.1} parent=5 // pred_fallthru
        _
      %p328 = scmp.le.s32.totalorder 2, %s16
      // Predicated region
      $region45: #{tpu_custom_call.1} parent=5 // pred_check
        %p329 = pneg %p328
      $region46: #{tpu_custom_call.1} parent=5 // pred_check_branch
        %331 = sbr.rel (%p329) target = $region48
      $region47: #{tpu_custom_call.1} parent=5 // pred_region
        %s332 = ssub.s32 %s16, 2
        // Predicated region
        $region49: #{tpu_custom_call.1} parent=47 // pred_check
          %p333 = pneg %p113
        $region50: #{tpu_custom_call.1} parent=47 // pred_check_branch
          %335 = sbr.rel (%p333) target = $region52
        $region51: #{tpu_custom_call.1} parent=47 // pred_region
          %s336 = sand.u32 %s98, 1
          %s337 = scalar_lea.sflag [#allocation4], %s336
          %s338 = sand.u32 %s98, 1
          %s339 = smul.addr %s338, 16
          %s340 = scalar_lea.vmem [#allocation7], %s339
          %341 = dma.done %s337, 256
        $region52: #{tpu_custom_call.1} parent=47 // pred_fallthru
          _
      $region48: #{tpu_custom_call.1} parent=5 // pred_fallthru
        _
    $region6: #{tpu_custom_call.1} parent=1 // loop_footer
      %s20 = sadd.s32 1, %s16
    $region7: #{tpu_custom_call.1} parent=1 // loop_footer_branch
      %15 = sbr.rel target = $region3
    $region8: #{tpu_custom_call.1} parent=1 // loop_exit
      _
    %342 = vsyncpa [#allocation3], 1
    %s343 = scalar_lea.sflag [#allocation3], 1
    %344 = vsyncpa %s343, 1
    %345 = vsyncpa [#allocation6], 1
    %346 = vsyncpa [#allocation4], 1
    %s347 = scalar_lea.sflag [#allocation4], 1
    %348 = vsyncpa %s347, 1

</llo_original>
